<compile_context>
chip_gen: v7x
topology: tpu7x:2x2x1
jax: 0.10.0
libtpu: 0.0.40
codegen_flags: <defaults>
</compile_context>

<pallas_src>
import functools

import jax
import jax.numpy as jnp
from jax.experimental import pallas as pl
from jax.experimental.pallas import tpu as pltpu

_LANE = 128  # TPU lane width; hidden / output widths are padded to this once.


def _round_up(x, m):
    return ((x + m - 1) // m) * m


def _mlp_kernel(x_ref, w1_ref, b1_ref, w2_ref, b2_ref, w3_ref, b3_ref, o_ref):
    # fc1: (TB, S) @ (S, 128) on the MXU (bf16 in, f32 accumulate); ReLU in f32.
    h1 = jnp.dot(x_ref[...].astype(jnp.bfloat16), w1_ref[...],
                 preferred_element_type=jnp.float32)
    h1 = jnp.maximum(h1 + b1_ref[...], 0.0)
    # fc2: (TB, 128) @ (128, 128)
    h2 = jnp.dot(h1.astype(jnp.bfloat16), w2_ref[...],
                 preferred_element_type=jnp.float32)
    h2 = jnp.maximum(h2 + b2_ref[...], 0.0)
    # fc3: (TB, 128) @ (128, 128)  -- no activation, matching SimpleNN.forward
    logits = jnp.dot(h2.astype(jnp.bfloat16), w3_ref[...],
                     preferred_element_type=jnp.float32)
    o_ref[...] = (logits + b3_ref[...]).astype(o_ref.dtype)


def _xla_bf16_forward(x, params):
    """Plain-XLA path with the exact same bf16-MXU / f32-accumulate math."""
    w1, b1, w2, b2, w3, b3 = params
    h1 = jnp.maximum(jnp.dot(x.astype(jnp.bfloat16), w1,
                             preferred_element_type=jnp.float32) + b1, 0.0)
    h2 = jnp.maximum(jnp.dot(h1.astype(jnp.bfloat16), w2,
                             preferred_element_type=jnp.float32) + b2, 0.0)
    return jnp.dot(h2.astype(jnp.bfloat16), w3,
                   preferred_element_type=jnp.float32) + b3


@functools.partial(jax.jit,
                   static_argnames=("out_dim", "block_b", "force_pallas"))
def simplenn_forward(x, params, out_dim, block_b=512, force_pallas=False):
    """x: (B, input_dim) f32. params: prepared (bf16 W, f32 b) padded tuple.

    Returns logits (B, out_dim) f32.
    """
    w1, b1, w2, b2, w3, b3 = params
    B, S = x.shape
    H1P = w1.shape[1]
    H2P = w2.shape[1]
    OUTP = w3.shape[1]

    # Tiny batches: custom-call launch + DMA setup dominates; a fused XLA dot
    # chain (same numerics) matches or beats the Pallas kernel at this size.
    if B < 64 and not force_pallas:
        return _xla_bf16_forward(x, params)[:, :out_dim]

    # Batch tile selection:
    #  - B <= 16: one full-array block (block == full dims satisfies (8,128) rule)
    #  - else: at least 2 grid steps (rounded to multiples of 8) so the
    #    "parallel" axis shards across both v7x TensorCores; capped at block_b
    #    (default 512) where grid-step-overhead amortization saturates.
    if B <= 16:
        tb = B
    else:
        tb = min(block_b, _round_up(pl.cdiv(B, 2), 8), _round_up(B, 8))
    grid_b = pl.cdiv(B, tb)  # partial last block: padded reads, OOB writes dropped

    flops = 2 * B * (S * H1P + H1P * H2P + H2P * OUTP)
    bytes_accessed = (x.size * 4                            # activations in (f32)
                      + (w1.size + w2.size + w3.size) * 2   # bf16 weights
                      + (b1.size + b2.size + b3.size) * 4   # f32 biases
                      + B * OUTP * 4)                       # lane-dense output (f32)

    out = pl.pallas_call(
        _mlp_kernel,
        out_shape=jax.ShapeDtypeStruct((B, OUTP), jnp.float32),
        grid=(grid_b,),
        in_specs=[
            pl.BlockSpec((tb, S), lambda b: (b, 0)),      # x: tiled over batch
            pl.BlockSpec((S, H1P), lambda b: (0, 0)),     # weights stay VMEM-resident
            pl.BlockSpec((1, H1P), lambda b: (0, 0)),
            pl.BlockSpec((H1P, H2P), lambda b: (0, 0)),
            pl.BlockSpec((1, H2P), lambda b: (0, 0)),
            pl.BlockSpec((H2P, OUTP), lambda b: (0, 0)),
            pl.BlockSpec((1, OUTP), lambda b: (0, 0)),
        ],
        out_specs=pl.BlockSpec((tb, OUTP), lambda b: (b, 0)),
        compiler_params=pltpu.CompilerParams(
            dimension_semantics=("parallel",)),
        cost_estimate=pl.CostEstimate(
            flops=flops, transcendentals=0, bytes_accessed=bytes_accessed),
    )(x, w1, b1, w2, b2, w3, b3)

    # Cheap column slice of the lane-dense slab (padded lanes are exactly 0).
    return out[:, :out_dim]


def init_simplenn_params(key, input_dim, output_dim, hidden1=64, hidden2=32):
    """torch.nn.Linear-style init (uniform +/- 1/sqrt(fan_in)), weights stored (in, out)."""
    def linear(k, fan_in, fan_out):
        kw, kb = jax.random.split(k)
        bound = 1.0 / (fan_in ** 0.5)
        w = jax.random.uniform(kw, (fan_in, fan_out), jnp.float32, -bound, bound)
        b = jax.random.uniform(kb, (fan_out,), jnp.float32, -bound, bound)
        return w, b

    k1, k2, k3 = jax.random.split(key, 3)
    w1, b1 = linear(k1, input_dim, hidden1)
    w2, b2 = linear(k2, hidden1, hidden2)
    w3, b3 = linear(k3, hidden2, output_dim)
    return (w1, b1, w2, b2, w3, b3)


def prepare_params(params, lane=_LANE):
    """One-time layout/dtype prep (hoisted out of the per-call forward path).

    Zero-pads hidden/output widths to the 128-lane width and casts weights to
    bf16. Padded bias lanes are exactly 0 so padded columns stay 0 through ReLU
    and padded w3 rows/cols contribute nothing to the real logits.
    """
    w1, b1, w2, b2, w3, b3 = params
    s, h1 = w1.shape
    h2 = w2.shape[1]
    out = w3.shape[1]
    h1p, h2p, outp = _round_up(h1, lane), _round_up(h2, lane), _round_up(out, lane)

    def pad_w(w, rows, cols):
        return jnp.zeros((rows, cols), jnp.float32).at[:w.shape[0], :w.shape[1]].set(w)

    def pad_b(b, cols):
        return jnp.zeros((1, cols), jnp.float32).at[0, :b.shape[0]].set(b)

    return (pad_w(w1, s, h1p).astype(jnp.bfloat16), pad_b(b1, h1p),
            pad_w(w2, h1p, h2p).astype(jnp.bfloat16), pad_b(b2, h2p),
            pad_w(w3, h2p, outp).astype(jnp.bfloat16), pad_b(b3, outp))


def _reference_bf16(x, prepared, out_dim):
    """Same bf16-matmul / f32-accumulate math path as the kernel."""
    return _xla_bf16_forward(x, prepared)[:, :out_dim]


def _reference_f32(x, params):
    """Full-f32 reference of the original module semantics."""
    w1, b1, w2, b2, w3, b3 = params
    h1 = jnp.maximum(x @ w1 + b1, 0.0)
    h2 = jnp.maximum(h1 @ w2 + b2, 0.0)
    return h2 @ w3 + b3


if __name__ == "__main__":
    INPUT_DIM = 13   # wine dataset features
    OUTPUT_DIM = 3   # wine target classes

    key = jax.random.PRNGKey(0)
    kx, kx2, kp = jax.random.split(key, 3)

    params_f32 = init_simplenn_params(kp, INPUT_DIM, OUTPUT_DIM)
    params = prepare_params(params_f32)   # done once, not per forward call

    # --- Small batch: force the Pallas path (single full-array block). ---
    B = 8
    x = jax.random.normal(kx, (B, INPUT_DIM), jnp.float32)
    out = jax.block_until_ready(
        simplenn_forward(x, params, OUTPUT_DIM, force_pallas=True))
    assert out.shape == (B, OUTPUT_DIM), out.shape
    assert jnp.allclose(out, _reference_bf16(x, params, OUTPUT_DIM),
                        atol=1e-3, rtol=1e-3), "mismatch vs bf16-path reference"
    assert jnp.allclose(out, _reference_f32(x, params_f32),
                        atol=2e-1, rtol=5e-2), "mismatch vs f32 reference"

    # Default dispatch at B=8 uses the XLA bypass; must agree with the kernel.
    out_xla = jax.block_until_ready(simplenn_forward(x, params, OUTPUT_DIM))
    assert jnp.allclose(out, out_xla, atol=1e-3, rtol=1e-3), \
        "Pallas path and XLA bypass disagree"

    # --- Medium batch: exercises 2 'parallel' grid steps + masked partial block
    #     (B=250 -> tb=128, grid=2, last block only 122 rows valid). ---
    BB = 250
    xb = jax.random.normal(kx2, (BB, INPUT_DIM), jnp.float32)
    outb = jax.block_until_ready(simplenn_forward(xb, params, OUTPUT_DIM))
    assert outb.shape == (BB, OUTPUT_DIM), outb.shape
    assert bool(jnp.all(jnp.isfinite(outb))), "non-finite values in output"
    assert jnp.allclose(outb, _reference_bf16(xb, params, OUTPUT_DIM),
                        atol=1e-3, rtol=1e-3), "batched mismatch vs bf16 reference"
    assert jnp.allclose(outb, _reference_f32(xb, params_f32),
                        atol=2e-1, rtol=5e-2), "batched mismatch vs f32 reference"

    print("KERNEL_OK")
</pallas_src>

<mosaic_0001>
module attributes {stable_mosaic.version = 11 : i64} {
  func.func @_mlp_kernel(%arg0: i32, %arg1: memref<8x13xf32, #tpu.memory_space<vmem>>, %arg2: memref<13x128xbf16, #tpu.memory_space<vmem>>, %arg3: memref<1x128xf32, #tpu.memory_space<vmem>>, %arg4: memref<128x128xbf16, #tpu.memory_space<vmem>>, %arg5: memref<1x128xf32, #tpu.memory_space<vmem>>, %arg6: memref<128x128xbf16, #tpu.memory_space<vmem>>, %arg7: memref<1x128xf32, #tpu.memory_space<vmem>>, %arg8: memref<8x128xf32, #tpu.memory_space<vmem>>) attributes {dimension_semantics = [#tpu.dimension_semantics<parallel>], iteration_bounds = array<i64: 1>, scalar_prefetch = 0 : i64, scratch_operands = 0 : i64, tpu.core_type = #tpu.core_type<tc>, window_params = [{transform_indices = @transform_0, window_bounds = array<i64: 8, 13>}, {pipeline_mode = #tpu.pipeline_mode<synchronous>, transform_indices = @transform_1, window_bounds = array<i64: 13, 128>}, {pipeline_mode = #tpu.pipeline_mode<synchronous>, transform_indices = @transform_2, window_bounds = array<i64: 1, 128>}, {pipeline_mode = #tpu.pipeline_mode<synchronous>, transform_indices = @transform_3, window_bounds = array<i64: 128, 128>}, {pipeline_mode = #tpu.pipeline_mode<synchronous>, transform_indices = @transform_4, window_bounds = array<i64: 1, 128>}, {pipeline_mode = #tpu.pipeline_mode<synchronous>, transform_indices = @transform_5, window_bounds = array<i64: 128, 128>}, {pipeline_mode = #tpu.pipeline_mode<synchronous>, transform_indices = @transform_6, window_bounds = array<i64: 1, 128>}, {transform_indices = @transform_7, window_bounds = array<i64: 8, 128>}]} {
    %c0 = arith.constant 0 : index
    %c0_0 = arith.constant 0 : index
    %0 = vector.load %arg1[%c0, %c0_0] : memref<8x13xf32, #tpu.memory_space<vmem>>, vector<8x13xf32>
    %1 = arith.truncf %0 : vector<8x13xf32> to vector<8x13xbf16>
    %c0_1 = arith.constant 0 : index
    %c0_2 = arith.constant 0 : index
    %2 = vector.load %arg2[%c0_1, %c0_2] : memref<13x128xbf16, #tpu.memory_space<vmem>>, vector<13x128xbf16>
    %cst = arith.constant dense<0.000000e+00> : vector<8x128xf32>
    %3 = tpu.matmul %1, %2, %cst {dimension_numbers = #tpu.dot_dimension_numbers<[1], [0], [0], [1], [0, 0, 1, 1], [], []>} : vector<8x13xbf16>, vector<13x128xbf16>, vector<8x128xf32> -> vector<8x128xf32>
    %c0_3 = arith.constant 0 : index
    %c0_4 = arith.constant 0 : index
    %4 = vector.load %arg3[%c0_3, %c0_4] : memref<1x128xf32, #tpu.memory_space<vmem>>, vector<1x128xf32>
    %5 = vector.broadcast %4 : vector<1x128xf32> to vector<8x128xf32>
    %6 = arith.addf %3, %5 : vector<8x128xf32>
    %cst_5 = arith.constant 0.000000e+00 : f32
    %7 = vector.broadcast %cst_5 : f32 to vector<8x128xf32>
    %8 = arith.maximumf %6, %7 : vector<8x128xf32>
    %9 = arith.truncf %8 : vector<8x128xf32> to vector<8x128xbf16>
    %c0_6 = arith.constant 0 : index
    %c0_7 = arith.constant 0 : index
    %10 = vector.load %arg4[%c0_6, %c0_7] : memref<128x128xbf16, #tpu.memory_space<vmem>>, vector<128x128xbf16>
    %cst_8 = arith.constant dense<0.000000e+00> : vector<8x128xf32>
    %11 = tpu.matmul %9, %10, %cst_8 {dimension_numbers = #tpu.dot_dimension_numbers<[1], [0], [0], [1], [0, 0, 1, 1], [], []>} : vector<8x128xbf16>, vector<128x128xbf16>, vector<8x128xf32> -> vector<8x128xf32>
    %c0_9 = arith.constant 0 : index
    %c0_10 = arith.constant 0 : index
    %12 = vector.load %arg5[%c0_9, %c0_10] : memref<1x128xf32, #tpu.memory_space<vmem>>, vector<1x128xf32>
    %13 = vector.broadcast %12 : vector<1x128xf32> to vector<8x128xf32>
    %14 = arith.addf %11, %13 : vector<8x128xf32>
    %cst_11 = arith.constant 0.000000e+00 : f32
    %15 = vector.broadcast %cst_11 : f32 to vector<8x128xf32>
    %16 = arith.maximumf %14, %15 : vector<8x128xf32>
    %17 = arith.truncf %16 : vector<8x128xf32> to vector<8x128xbf16>
    %c0_12 = arith.constant 0 : index
    %c0_13 = arith.constant 0 : index
    %18 = vector.load %arg6[%c0_12, %c0_13] : memref<128x128xbf16, #tpu.memory_space<vmem>>, vector<128x128xbf16>
    %cst_14 = arith.constant dense<0.000000e+00> : vector<8x128xf32>
    %19 = tpu.matmul %17, %18, %cst_14 {dimension_numbers = #tpu.dot_dimension_numbers<[1], [0], [0], [1], [0, 0, 1, 1], [], []>} : vector<8x128xbf16>, vector<128x128xbf16>, vector<8x128xf32> -> vector<8x128xf32>
    %c0_15 = arith.constant 0 : index
    %c0_16 = arith.constant 0 : index
    %20 = vector.load %arg7[%c0_15, %c0_16] : memref<1x128xf32, #tpu.memory_space<vmem>>, vector<1x128xf32>
    %21 = vector.broadcast %20 : vector<1x128xf32> to vector<8x128xf32>
    %22 = arith.addf %19, %21 : vector<8x128xf32>
    %c0_17 = arith.constant 0 : index
    %c0_18 = arith.constant 0 : index
    %23 = vector.load %arg8[%c0_17, %c0_18] : memref<8x128xf32, #tpu.memory_space<vmem>>, vector<8x128xf32>
    tpu.vector_store %arg8[%c0_17, %c0_18], %22 {strides = array<i32>} : memref<8x128xf32, #tpu.memory_space<vmem>>, vector<8x128xf32>,
    return
  }
  func.func @transform_0(%arg0: i32) -> (i32, i32) {
    %c0_i32 = arith.constant 0 : i32
    %c0_i32_0 = arith.constant 0 : i32
    return %arg0, %c0_i32 : i32, i32
  }
  func.func @transform_1(%arg0: i32) -> (i32, i32) {
    %c0_i32 = arith.constant 0 : i32
    %c0_i32_0 = arith.constant 0 : i32
    %c0_i32_1 = arith.constant 0 : i32
    return %c0_i32, %c0_i32_0 : i32, i32
  }
  func.func @transform_2(%arg0: i32) -> (i32, i32) {
    %c0_i32 = arith.constant 0 : i32
    %c0_i32_0 = arith.constant 0 : i32
    %c0_i32_1 = arith.constant 0 : i32
    return %c0_i32, %c0_i32_0 : i32, i32
  }
  func.func @transform_3(%arg0: i32) -> (i32, i32) {
    %c0_i32 = arith.constant 0 : i32
    %c0_i32_0 = arith.constant 0 : i32
    %c0_i32_1 = arith.constant 0 : i32
    return %c0_i32, %c0_i32_0 : i32, i32
  }
  func.func @transform_4(%arg0: i32) -> (i32, i32) {
    %c0_i32 = arith.constant 0 : i32
    %c0_i32_0 = arith.constant 0 : i32
    %c0_i32_1 = arith.constant 0 : i32
    return %c0_i32, %c0_i32_0 : i32, i32
  }
  func.func @transform_5(%arg0: i32) -> (i32, i32) {
    %c0_i32 = arith.constant 0 : i32
    %c0_i32_0 = arith.constant 0 : i32
    %c0_i32_1 = arith.constant 0 : i32
    return %c0_i32, %c0_i32_0 : i32, i32
  }
  func.func @transform_6(%arg0: i32) -> (i32, i32) {
    %c0_i32 = arith.constant 0 : i32
    %c0_i32_0 = arith.constant 0 : i32
    %c0_i32_1 = arith.constant 0 : i32
    return %c0_i32, %c0_i32_0 : i32, i32
  }
  func.func @transform_7(%arg0: i32) -> (i32, i32) {
    %c0_i32 = arith.constant 0 : i32
    %c0_i32_0 = arith.constant 0 : i32
    return %arg0, %c0_i32 : i32, i32
  }
}

</mosaic_0001>

<llo_original>
// kernel: simplenn_forward.1
$region0: #{simplenn_forward.1}
  #allocation0 [shape = 'u32[]', space=smem, size = 0x4, offset = 0x4, fixed_abs, tag = 'smem constant byte address 0x4 - core index']
  #allocation1 [shape = 'u32[144,128]{1,0:T(1,128)}', space=vmem, size = 0x12000, scoped, tag = 'internal scratch']
  %s0 = inlined_call_operand.hbm [shape: f32[8,13], index: 0, kind: input, shape index: {}]
  %s1 = inlined_call_operand.hbm [shape: bf16[13,128], index: 1, kind: input, shape index: {}]
  %s2 = inlined_call_operand.vmem [shape: f32[1,128], index: 2, kind: input, shape index: {}]
  %s3 = inlined_call_operand.hbm [shape: bf16[128,128], index: 3, kind: input, shape index: {}]
  %s4 = inlined_call_operand.vmem [shape: f32[1,128], index: 4, kind: input, shape index: {}]
  %s5 = inlined_call_operand.hbm [shape: bf16[128,128], index: 5, kind: input, shape index: {}]
  %s6 = inlined_call_operand.vmem [shape: f32[1,128], index: 6, kind: input, shape index: {}]
  %s7 = inlined_call_operand.vmem [shape: f32[8,128], index: 7, kind: output, shape index: {}]
  %s8 = sld [smem:[#allocation0]]
  $region54: #{simplenn_forward.1} parent=0
    _
  %s10 = ssub.s32 1, %s8
  %s11 = scalar_select 0, %s10, %s8
  $region1: #{simplenn_forward.1} parent=0
    #allocation2 [shape = 'u8[4096]{0}', space=vmem, size = 0x1000, scoped, tag = 'input window, operand 0, single buffered']
    #allocation3 [shape = 's32[1]{0}', space=sflag, size = 0x4, scoped, tag = 'scoped memory for simplenn_forward.1']
    #allocation4 [shape = 'u8[4096]{0}', space=vmem, size = 0x1000, scoped, tag = 'input window, operand 1, single buffered']
    #allocation5 [shape = 's32[1]{0}', space=sflag, size = 0x4, scoped, tag = 'scoped memory for simplenn_forward.1']
    #allocation6 [shape = 'u8[32768]{0}', space=vmem, size = 0x8000, scoped, tag = 'input window, operand 3, single buffered']
    #allocation7 [shape = 'u8[32768]{0}', space=vmem, size = 0x8000, scoped, tag = 'input window, operand 5, single buffered']
    #allocation8 [shape = 's32[1]{0}', space=sflag, size = 0x4, scoped, tag = 'scoped memory for simplenn_forward.1']
    %12 = vsyncpa [#allocation3], 0
    %13 = vsyncpa [#allocation5], 0
    %14 = vsyncpa [#allocation8], 0
    // Predicated region
    $region2: #{simplenn_forward.1} parent=1 // pred_check
      _
    $region3: #{simplenn_forward.1} parent=1 // pred_check_branch
      %16 = sbr.rel (0) target = $region5
    $region4: #{simplenn_forward.1} parent=1 // pred_region
      %s18 = ssub.s32 128, 128
      %19 = vsyncadd [#allocation3], %s18
      %s21 = sshll.u32 [#allocation2], 4
      %s22 = int_to_ptr.vmem [resolvable:$true] %s21
      %24 = dma.hbm_to_vmem [thread:$0]  %s0, 128, %s22, [#allocation3]
    $region5: #{simplenn_forward.1} parent=1 // pred_fallthru
      _
    // Predicated region
    $region6: #{simplenn_forward.1} parent=1 // pred_check
      _
    $region7: #{simplenn_forward.1} parent=1 // pred_check_branch
      %26 = sbr.rel (0) target = $region9
    $region8: #{simplenn_forward.1} parent=1 // pred_region
      %s28 = ssub.s32 128, 128
      %29 = vsyncadd [#allocation5], %s28
      %s30 = sshll.u32 [#allocation4], 4
      %s31 = int_to_ptr.vmem [resolvable:$true] %s30
      %36 = dma.hbm_to_vmem [thread:$0]  %s1, 128, %s31, [#allocation5], 64, 64, 4
    $region9: #{simplenn_forward.1} parent=1 // pred_fallthru
      _
    // Predicated region
    $region10: #{simplenn_forward.1} parent=1 // pred_check
      _
    $region11: #{simplenn_forward.1} parent=1 // pred_check_branch
      %38 = sbr.rel (0) target = $region13
    $region12: #{simplenn_forward.1} parent=1 // pred_region
      _
    $region13: #{simplenn_forward.1} parent=1 // pred_fallthru
      _
    // Predicated region
    $region14: #{simplenn_forward.1} parent=1 // pred_check
      _
    $region15: #{simplenn_forward.1} parent=1 // pred_check_branch
      %40 = sbr.rel (0) target = $region17
    $region16: #{simplenn_forward.1} parent=1 // pred_region
      %s42 = ssub.s32 1024, 1024
      %43 = vsyncadd [#allocation5], %s42
      %s44 = sshll.u32 [#allocation6], 4
      %s45 = int_to_ptr.vmem [resolvable:$true] %s44
      %50 = dma.hbm_to_vmem [thread:$0]  %s3, 1024, %s45, [#allocation5], 64, 64, 4
    $region17: #{simplenn_forward.1} parent=1 // pred_fallthru
      _
    // Predicated region
    $region18: #{simplenn_forward.1} parent=1 // pred_check
      _
    $region19: #{simplenn_forward.1} parent=1 // pred_check_branch
      %52 = sbr.rel (0) target = $region21
    $region20: #{simplenn_forward.1} parent=1 // pred_region
      _
    $region21: #{simplenn_forward.1} parent=1 // pred_fallthru
      _
    // Predicated region
    $region22: #{simplenn_forward.1} parent=1 // pred_check
      _
    $region23: #{simplenn_forward.1} parent=1 // pred_check_branch
      %54 = sbr.rel (0) target = $region25
    $region24: #{simplenn_forward.1} parent=1 // pred_region
      %s56 = ssub.s32 1024, 1024
      %57 = vsyncadd [#allocation8], %s56
      %s58 = sshll.u32 [#allocation7], 4
      %s59 = int_to_ptr.vmem [resolvable:$true] %s58
      %64 = dma.hbm_to_vmem [thread:$0]  %s5, 1024, %s59, [#allocation8], 64, 64, 4
    $region25: #{simplenn_forward.1} parent=1 // pred_fallthru
      _
    // Predicated region
    $region26: #{simplenn_forward.1} parent=1 // pred_check
      _
    $region27: #{simplenn_forward.1} parent=1 // pred_check_branch
      %66 = sbr.rel (0) target = $region29
    $region28: #{simplenn_forward.1} parent=1 // pred_region
      _
    $region29: #{simplenn_forward.1} parent=1 // pred_fallthru
      _
    // Predicated region
    $region30: #{simplenn_forward.1} parent=1 // pred_check
      _
    $region31: #{simplenn_forward.1} parent=1 // pred_check_branch
      %68 = sbr.rel (0) target = $region33
    $region32: #{simplenn_forward.1} parent=1 // pred_region
      %69 = dma.done [#allocation3], 128
    $region33: #{simplenn_forward.1} parent=1 // pred_fallthru
      _
    // Predicated region
    $region34: #{simplenn_forward.1} parent=1 // pred_check
      _
    $region35: #{simplenn_forward.1} parent=1 // pred_check_branch
      %71 = sbr.rel (0) target = $region37
    $region36: #{simplenn_forward.1} parent=1 // pred_region
      %72 = dma.done [#allocation5], 128
    $region37: #{simplenn_forward.1} parent=1 // pred_fallthru
      _
    // Predicated region
    $region38: #{simplenn_forward.1} parent=1 // pred_check
      _
    $region39: #{simplenn_forward.1} parent=1 // pred_check_branch
      %74 = sbr.rel (0) target = $region41
    $region40: #{simplenn_forward.1} parent=1 // pred_region
      %75 = dma.done [#allocation5], 1024
    $region41: #{simplenn_forward.1} parent=1 // pred_fallthru
      _
    // Predicated region
    $region42: #{simplenn_forward.1} parent=1 // pred_check
      _
    $region43: #{simplenn_forward.1} parent=1 // pred_check_branch
      %77 = sbr.rel (0) target = $region45
    $region44: #{simplenn_forward.1} parent=1 // pred_region
      %78 = dma.done [#allocation8], 1024
    $region45: #{simplenn_forward.1} parent=1 // pred_fallthru
      _
    %v80 = vld [vmem:[#allocation2] sm:$0xff]
    %v81 = vpack.c.bf16 %v80, %v80
    %v82 = vld [vmem:[#allocation4] sm:$0xf]
    %v83 = vld [vmem:[#allocation4 + $0x4] sm:$0x7]
    %v84 = vld [vmem:[%s2] sm:$0x1]
    %v86 = vlaneseq
    %v87 = vshrl.u32 %v86, 7
    %v88 = vsub.s32 0, %v87
    %v89 = vrot.slane %v84, %v88
    %v93 = vunpack.c.l.b16 %v82
    %v94 = vunpack.c.l.b16 %v83
    %v95 = vpack.c.b16 %v94, %v93
    %vm96 = vcmask 105472
    %v98 = vsel %vm96, %v81, 0
    %vm100 = vcmask 1045504
    %vm101 = vcmask 1046528
    %v102 = vsel %vm100, 4294967295, 65535
    %v103 = vsel %vm101, %v102, 0
    %v105 = vand.u32 %v95, %v103
    %107 = vmatprep.subr.bf16.mxu0 0
    %108 = vmatpush1.bf16.msra.mxu0 %v105
    %109 = vmatprep.subr.bf16.mxu0 0
    %110 = vmatpush1.bf16.msra.mxu0 0
    %111 = vmatprep.subr.bf16.mxu0 0
    %112 = vmatpush1.bf16.msra.mxu0 0
    %113 = vmatprep.subr.bf16.mxu0 0
    %114 = vmatpush1.bf16.msra.mxu0 0
    %115 = vmatprep.subr.bf16.mxu0 0
    %116 = vmatpush1.bf16.msra.mxu0 0
    %117 = vmatprep.subr.bf16.mxu0 0
    %118 = vmatpush1.bf16.msra.mxu0 0
    %119 = vmatprep.subr.bf16.mxu0 0
    %120 = vmatpush1.bf16.msra.mxu0 0
    %121 = vmatprep.subr.bf16.mxu0 0
    %122 = vmatpush1.bf16.msra.mxu0 0
    %123 = vmatprep.subr.bf16.mxu0 0
    %124 = vmatpush1.bf16.msra.mxu0 0
    %125 = vmatprep.subr.bf16.mxu0 0
    %126 = vmatpush1.bf16.msra.mxu0 0
    %127 = vmatprep.subr.bf16.mxu0 0
    %128 = vmatpush1.bf16.msra.mxu0 0
    %129 = vmatprep.subr.bf16.mxu0 0
    %130 = vmatpush1.bf16.msra.mxu0 0
    %131 = vmatprep.subr.bf16.mxu0 0
    %132 = vmatpush1.bf16.msra.mxu0 0
    %133 = vmatprep.subr.bf16.mxu0 0
    %134 = vmatpush1.bf16.msra.mxu0 0
    %135 = vmatprep.subr.bf16.mxu0 0
    %136 = vmatpush1.bf16.msra.mxu0 0
    %137 = vmatprep.subr.bf16.mxu0 0
    %138 = vmatpush1.bf16.msra.mxu0 0
    %139 = vmatprep.mubr.bf16.mxu0 0
    %140 = vmatmul.mubr.bf16.gmra.mrb[0].mxu0 %v98
    %v141 = vpop.f32.mrb[0].mxu0
    %v142 = vadd.f32 %v89, %v141
    %v143 = vpop.f32.mrb[0].mxu0
    %v144 = vpop.f32.mrb[0].mxu0
    %v145 = vpop.f32.mrb[0].mxu0
    %146 = vdwg.mxu0
    %v147 = vmax.f32 %v142, 0.0
    %v148 = vpack.c.bf16 %v147, %v147
    %v149 = vld [vmem:[#allocation6] sm:$0xf]
    %v150 = vld [vmem:[#allocation6 + $0x4] sm:$0xf]
    %v151 = vld [vmem:[#allocation6 + $0x8] sm:$0xf]
    %v152 = vld [vmem:[#allocation6 + $0xc] sm:$0xf]
    %v153 = vld [vmem:[#allocation6 + $0x10] sm:$0xf]
    %v154 = vld [vmem:[#allocation6 + $0x14] sm:$0xf]
    %v155 = vld [vmem:[#allocation6 + $0x18] sm:$0xf]
    %v156 = vld [vmem:[#allocation6 + $0x1c] sm:$0xf]
    %v157 = vld [vmem:[#allocation6 + $0x20] sm:$0xf]
    %v158 = vld [vmem:[#allocation6 + $0x24] sm:$0xf]
    %v159 = vld [vmem:[#allocation6 + $0x28] sm:$0xf]
    %v160 = vld [vmem:[#allocation6 + $0x2c] sm:$0xf]
    %v161 = vld [vmem:[#allocation6 + $0x30] sm:$0xf]
    %v162 = vld [vmem:[#allocation6 + $0x34] sm:$0xf]
    %v163 = vld [vmem:[#allocation6 + $0x38] sm:$0xf]
    %v164 = vld [vmem:[#allocation6 + $0x3c] sm:$0xf]
    %v165 = vld [vmem:[%s4] sm:$0x1]
    %v167 = vlaneseq
    %v168 = vshrl.u32 %v167, 7
    %v169 = vsub.s32 0, %v168
    %v170 = vrot.slane %v165, %v169
    %v188 = vunpack.c.l.b16 %v149
    %v189 = vunpack.c.l.b16 %v150
    %v190 = vunpack.c.l.b16 %v151
    %v191 = vunpack.c.l.b16 %v152
    %v192 = vunpack.c.l.b16 %v153
    %v193 = vunpack.c.l.b16 %v154
    %v194 = vunpack.c.l.b16 %v155
    %v195 = vunpack.c.l.b16 %v156
    %v196 = vunpack.c.l.b16 %v157
    %v197 = vunpack.c.l.b16 %v158
    %v198 = vunpack.c.l.b16 %v159
    %v199 = vunpack.c.l.b16 %v160
    %v200 = vunpack.c.l.b16 %v161
    %v201 = vunpack.c.l.b16 %v162
    %v202 = vunpack.c.l.b16 %v163
    %v203 = vunpack.c.l.b16 %v164
    %v204 = vpack.c.b16 %v189, %v188
    %v205 = vpack.c.b16 %v191, %v190
    %v206 = vpack.c.b16 %v193, %v192
    %v207 = vpack.c.b16 %v195, %v194
    %v208 = vpack.c.b16 %v197, %v196
    %v209 = vpack.c.b16 %v199, %v198
    %v210 = vpack.c.b16 %v201, %v200
    %v211 = vpack.c.b16 %v203, %v202
    %220 = vmatprep.subr.bf16.mxu0 0
    %221 = vmatpush1.bf16.msra.mxu0 %v204
    %222 = vmatprep.subr.bf16.mxu0 0
    %223 = vmatpush1.bf16.msra.mxu0 %v205
    %224 = vmatprep.subr.bf16.mxu0 0
    %225 = vmatpush1.bf16.msra.mxu0 %v206
    %226 = vmatprep.subr.bf16.mxu0 0
    %227 = vmatpush1.bf16.msra.mxu0 %v207
    %228 = vmatprep.subr.bf16.mxu0 0
    %229 = vmatpush1.bf16.msra.mxu0 %v208
    %230 = vmatprep.subr.bf16.mxu0 0
    %231 = vmatpush1.bf16.msra.mxu0 %v209
    %232 = vmatprep.subr.bf16.mxu0 0
    %233 = vmatpush1.bf16.msra.mxu0 %v210
    %234 = vmatprep.subr.bf16.mxu0 0
    %235 = vmatpush1.bf16.msra.mxu0 %v211
    %236 = vmatprep.subr.bf16.mxu0 0
    %237 = vmatpush1.bf16.msra.mxu0 0
    %238 = vmatprep.subr.bf16.mxu0 0
    %239 = vmatpush1.bf16.msra.mxu0 0
    %240 = vmatprep.subr.bf16.mxu0 0
    %241 = vmatpush1.bf16.msra.mxu0 0
    %242 = vmatprep.subr.bf16.mxu0 0
    %243 = vmatpush1.bf16.msra.mxu0 0
    %244 = vmatprep.subr.bf16.mxu0 0
    %245 = vmatpush1.bf16.msra.mxu0 0
    %246 = vmatprep.subr.bf16.mxu0 0
    %247 = vmatpush1.bf16.msra.mxu0 0
    %248 = vmatprep.subr.bf16.mxu0 0
    %249 = vmatpush1.bf16.msra.mxu0 0
    %250 = vmatprep.subr.bf16.mxu0 0
    %251 = vmatpush1.bf16.msra.mxu0 0
    %252 = vmatprep.mubr.bf16.mxu0 0
    %253 = vmatmul.mubr.bf16.gmra.mrb[0].mxu0 %v148
    %v254 = vpop.f32.mrb[0].mxu0
    %v255 = vadd.f32 %v170, %v254
    %v256 = vpop.f32.mrb[0].mxu0
    %v257 = vpop.f32.mrb[0].mxu0
    %v258 = vpop.f32.mrb[0].mxu0
    %259 = vdwg.mxu0
    %v260 = vmax.f32 %v255, 0.0
    %v261 = vpack.c.bf16 %v260, %v260
    %v262 = vld [vmem:[#allocation7] sm:$0xf]
    %v263 = vld [vmem:[#allocation7 + $0x4] sm:$0xf]
    %v264 = vld [vmem:[#allocation7 + $0x8] sm:$0xf]
    %v265 = vld [vmem:[#allocation7 + $0xc] sm:$0xf]
    %v266 = vld [vmem:[#allocation7 + $0x10] sm:$0xf]
    %v267 = vld [vmem:[#allocation7 + $0x14] sm:$0xf]
    %v268 = vld [vmem:[#allocation7 + $0x18] sm:$0xf]
    %v269 = vld [vmem:[#allocation7 + $0x1c] sm:$0xf]
    %v270 = vld [vmem:[#allocation7 + $0x20] sm:$0xf]
    %v271 = vld [vmem:[#allocation7 + $0x24] sm:$0xf]
    %v272 = vld [vmem:[#allocation7 + $0x28] sm:$0xf]
    %v273 = vld [vmem:[#allocation7 + $0x2c] sm:$0xf]
    %v274 = vld [vmem:[#allocation7 + $0x30] sm:$0xf]
    %v275 = vld [vmem:[#allocation7 + $0x34] sm:$0xf]
    %v276 = vld [vmem:[#allocation7 + $0x38] sm:$0xf]
    %v277 = vld [vmem:[#allocation7 + $0x3c] sm:$0xf]
    %v278 = vld [vmem:[%s6] sm:$0x1]
    %v280 = vlaneseq
    %v281 = vshrl.u32 %v280, 7
    %v282 = vsub.s32 0, %v281
    %v283 = vrot.slane %v278, %v282
    %v301 = vunpack.c.l.b16 %v262
    %v302 = vunpack.c.l.b16 %v263
    %v303 = vunpack.c.l.b16 %v264
    %v304 = vunpack.c.l.b16 %v265
    %v305 = vunpack.c.l.b16 %v266
    %v306 = vunpack.c.l.b16 %v267
    %v307 = vunpack.c.l.b16 %v268
    %v308 = vunpack.c.l.b16 %v269
    %v309 = vunpack.c.l.b16 %v270
    %v310 = vunpack.c.l.b16 %v271
    %v311 = vunpack.c.l.b16 %v272
    %v312 = vunpack.c.l.b16 %v273
    %v313 = vunpack.c.l.b16 %v274
    %v314 = vunpack.c.l.b16 %v275
    %v315 = vunpack.c.l.b16 %v276
    %v316 = vunpack.c.l.b16 %v277
    %v317 = vpack.c.b16 %v302, %v301
    %v318 = vpack.c.b16 %v304, %v303
    %v319 = vpack.c.b16 %v306, %v305
    %v320 = vpack.c.b16 %v308, %v307
    %v321 = vpack.c.b16 %v310, %v309
    %v322 = vpack.c.b16 %v312, %v311
    %v323 = vpack.c.b16 %v314, %v313
    %v324 = vpack.c.b16 %v316, %v315
    %333 = vmatprep.subr.bf16.mxu0 0
    %334 = vmatpush1.bf16.msra.mxu0 %v317
    %335 = vmatprep.subr.bf16.mxu0 0
    %336 = vmatpush1.bf16.msra.mxu0 %v318
    %337 = vmatprep.subr.bf16.mxu0 0
    %338 = vmatpush1.bf16.msra.mxu0 %v319
    %339 = vmatprep.subr.bf16.mxu0 0
    %340 = vmatpush1.bf16.msra.mxu0 %v320
    %341 = vmatprep.subr.bf16.mxu0 0
    %342 = vmatpush1.bf16.msra.mxu0 %v321
    %343 = vmatprep.subr.bf16.mxu0 0
    %344 = vmatpush1.bf16.msra.mxu0 %v322
    %345 = vmatprep.subr.bf16.mxu0 0
    %346 = vmatpush1.bf16.msra.mxu0 %v323
    %347 = vmatprep.subr.bf16.mxu0 0
    %348 = vmatpush1.bf16.msra.mxu0 %v324
    %349 = vmatprep.subr.bf16.mxu0 0
    %350 = vmatpush1.bf16.msra.mxu0 0
    %351 = vmatprep.subr.bf16.mxu0 0
    %352 = vmatpush1.bf16.msra.mxu0 0
    %353 = vmatprep.subr.bf16.mxu0 0
    %354 = vmatpush1.bf16.msra.mxu0 0
    %355 = vmatprep.subr.bf16.mxu0 0
    %356 = vmatpush1.bf16.msra.mxu0 0
    %357 = vmatprep.subr.bf16.mxu0 0
    %358 = vmatpush1.bf16.msra.mxu0 0
    %359 = vmatprep.subr.bf16.mxu0 0
    %360 = vmatpush1.bf16.msra.mxu0 0
    %361 = vmatprep.subr.bf16.mxu0 0
    %362 = vmatpush1.bf16.msra.mxu0 0
    %363 = vmatprep.subr.bf16.mxu0 0
    %364 = vmatpush1.bf16.msra.mxu0 0
    %365 = vmatprep.mubr.bf16.mxu0 0
    %366 = vmatmul.mubr.bf16.gmra.mrb[0].mxu0 %v261
    %v367 = vpop.f32.mrb[0].mxu0
    %v368 = vadd.f32 %v283, %v367
    %v369 = vpop.f32.mrb[0].mxu0
    %v370 = vpop.f32.mrb[0].mxu0
    %v371 = vpop.f32.mrb[0].mxu0
    %372 = vdwg.mxu0
    %373 = vst [vmem:[%s7] sm:$0xff] %v368
    // Predicated region
    $region46: #{simplenn_forward.1} parent=1 // pred_check
      _
    $region47: #{simplenn_forward.1} parent=1 // pred_check_branch
      %375 = sbr.rel (0) target = $region49
    $region48: #{simplenn_forward.1} parent=1 // pred_region
      _
    $region49: #{simplenn_forward.1} parent=1 // pred_fallthru
      _
    // Predicated region
    $region50: #{simplenn_forward.1} parent=1 // pred_check
      _
    $region51: #{simplenn_forward.1} parent=1 // pred_check_branch
      %377 = sbr.rel (0) target = $region53
    $region52: #{simplenn_forward.1} parent=1 // pred_region
      _
    $region53: #{simplenn_forward.1} parent=1 // pred_fallthru
      _
    %378 = vsyncpa [#allocation3], 1
    %379 = vsyncpa [#allocation5], 1
    %380 = vsyncpa [#allocation8], 1

</llo_original>
